<compile_context>
chip_gen: v6e
topology: v6e:2x2x1
jax: 0.10.0
libtpu: 0.0.40
codegen_flags: <defaults>
</compile_context>

<pallas_src>
import functools

import jax
import jax.numpy as jnp
from jax.experimental import pallas as pl
from jax.experimental.pallas import tpu as pltpu

NDIM = 6
WIDTH = 32
DEPTH = 2          # two hidden Linear(width, width) layers, as in the torch module
SCALE = 0.01       # registered buffer 'scale' (folded into layer-4 parameters)

# Row offsets of each layer inside the packed parameter slabs.
_L1 = 0 * WIDTH
_L2 = 1 * WIDTH
_L3 = 2 * WIDTH
_L4 = 3 * WIDTH
_SLAB_ROWS = 4 * WIDTH        # 128 rows; rows _L4+NDIM .. 127 are zero padding


def _round_up(x, m):
    return ((x + m - 1) // m) * m


def _mlp_kernel(z_ref, w_ref, b_ref, out_ref):
    # z_ref  : (NDIM, B)  feature-major input tile (B = block_batch, multiple of 128)
    # w_ref  : (128, 32)  packed weights, torch (out, in) orientation per layer
    # b_ref  : (128, 1)   packed biases (broadcast over the lane/batch axis)
    # out_ref: (NDIM, B)  feature-major output tile (lane-dense)
    x = z_ref[...]                                                   # (6, B) f32

    # Linear(6, 32) + Tanh                              h = W1 @ x + b1
    h = jnp.tanh(
        jnp.dot(w_ref[_L1:_L1 + WIDTH, 0:NDIM], x,
                preferred_element_type=jnp.float32) + b_ref[_L1:_L1 + WIDTH, :])
    # DEPTH x (Linear(32, 32) + Dropout(0.0) [identity] + Tanh)
    h = jnp.tanh(
        jnp.dot(w_ref[_L2:_L2 + WIDTH, :], h,
                preferred_element_type=jnp.float32) + b_ref[_L2:_L2 + WIDTH, :])
    h = jnp.tanh(
        jnp.dot(w_ref[_L3:_L3 + WIDTH, :], h,
                preferred_element_type=jnp.float32) + b_ref[_L3:_L3 + WIDTH, :])
    # Linear(32, 6); SCALE is already folded into these weights/bias.
    y = (jnp.dot(w_ref[_L4:_L4 + NDIM, :], h,
                 preferred_element_type=jnp.float32) + b_ref[_L4:_L4 + NDIM, :])
    out_ref[...] = y.astype(out_ref.dtype)


@functools.partial(jax.jit, static_argnames=("block_batch",))
def nn_transform(z, w_slab, b_slab, *, block_batch=4096):
    """Fused NNTransform forward. z: (N, NDIM) f32 -> (N, NDIM) f32."""
    n, d = z.shape
    assert d == NDIM

    # Batch-on-lanes layout; pad the batch up to a multiple of the block size.
    block = max(128, min(block_batch, _round_up(n, 128)))
    n_pad = _round_up(n, block)
    z_t = z.T                                                        # (NDIM, N)
    if n_pad != n:
        z_t = jnp.pad(z_t, ((0, 0), (0, n_pad - n)))

    out_t = pl.pallas_call(
        _mlp_kernel,
        out_shape=jax.ShapeDtypeStruct((NDIM, n_pad), z.dtype),
        grid=(n_pad // block,),
        in_specs=[
            pl.BlockSpec((NDIM, block), lambda i: (0, i)),           # Z tile
            pl.BlockSpec((_SLAB_ROWS, WIDTH), lambda i: (0, 0)),     # weight slab
            pl.BlockSpec((_SLAB_ROWS, 1), lambda i: (0, 0)),         # bias slab
        ],
        out_specs=pl.BlockSpec((NDIM, block), lambda i: (0, i)),
        compiler_params=pltpu.CompilerParams(
            dimension_semantics=("parallel",),                       # megacore on v7x
            vmem_limit_bytes=64 << 20),
    )(z_t, w_slab, b_slab)

    return out_t[:, :n].T                                            # back to (N, NDIM)


def init_params(key):
    """torch.nn.Linear default init: W ~ U[-1/sqrt(fan_in), 1/sqrt(fan_in)] of shape
    (out, in); b with the same bound, shape (out,). Matches the PyTorch module."""
    def linear(k, fan_in, fan_out):
        kw, kb = jax.random.split(k)
        bound = 1.0 / (fan_in ** 0.5)
        w = jax.random.uniform(kw, (fan_out, fan_in), jnp.float32, -bound, bound)
        b = jax.random.uniform(kb, (fan_out,), jnp.float32, -bound, bound)
        return w, b

    k1, k2, k3, k4 = jax.random.split(key, 4)
    w1, b1 = linear(k1, NDIM, WIDTH)
    w2, b2 = linear(k2, WIDTH, WIDTH)
    w3, b3 = linear(k3, WIDTH, WIDTH)
    w4, b4 = linear(k4, WIDTH, NDIM)
    return {"w1": w1, "b1": b1, "w2": w2, "b2": b2,
            "w3": w3, "b3": b3, "w4": w4, "b4": b4}


def pack_params(p, scale=SCALE):
    """Pack the 4 layers into one (128, 32) weight slab and one (128, 1) bias slab,
    folding SCALE into the last layer so the kernel needs no final multiply."""
    w = jnp.zeros((_SLAB_ROWS, WIDTH), jnp.float32)
    b = jnp.zeros((_SLAB_ROWS, 1), jnp.float32)
    w = w.at[_L1:_L1 + WIDTH, 0:NDIM].set(p["w1"])
    w = w.at[_L2:_L2 + WIDTH, :].set(p["w2"])
    w = w.at[_L3:_L3 + WIDTH, :].set(p["w3"])
    w = w.at[_L4:_L4 + NDIM, :].set(p["w4"] * scale)
    b = b.at[_L1:_L1 + WIDTH, 0].set(p["b1"])
    b = b.at[_L2:_L2 + WIDTH, 0].set(p["b2"])
    b = b.at[_L3:_L3 + WIDTH, 0].set(p["b3"])
    b = b.at[_L4:_L4 + NDIM, 0].set(p["b4"] * scale)
    return w, b


def nn_transform_ref(z, p):
    """Pure-JAX reference in the original torch orientation (y = x @ W.T + b)."""
    h = jnp.tanh(z @ p["w1"].T + p["b1"])
    h = jnp.tanh(h @ p["w2"].T + p["b2"])   # Dropout(0.0) is an identity
    h = jnp.tanh(h @ p["w3"].T + p["b3"])
    return (h @ p["w4"].T + p["b4"]) * SCALE


if __name__ == "__main__":
    key = jax.random.PRNGKey(0)
    kz, kp = jax.random.split(key)

    N = 200  # deliberately not a multiple of 128 to exercise the padded path
    z = jax.random.normal(kz, (N, NDIM), dtype=jnp.float32)
    params = init_params(kp)
    w_slab, b_slab = pack_params(params)

    out = jax.block_until_ready(nn_transform(z, w_slab, b_slab))
    ref = nn_transform_ref(z, params)

    assert out.shape == (N, NDIM) and out.dtype == jnp.float32
    # Kernel MXU matmuls run in a transposed orientation vs. the XLA reference, so
    # default-precision f32 accumulation differs slightly; outputs are O(1e-3) after
    # the *0.01 scale, hence the mixed tolerance below.
    assert jnp.allclose(out, ref, atol=2e-4, rtol=1e-3), float(
        jnp.max(jnp.abs(out - ref)))
    print("KERNEL_OK")
</pallas_src>

<mosaic_0001>
module attributes {stable_mosaic.version = 11 : i64} {
  func.func @_mlp_kernel(%arg0: i32, %arg1: memref<6x256xf32, #tpu.memory_space<vmem>>, %arg2: memref<128x32xf32, #tpu.memory_space<vmem>>, %arg3: memref<128x1xf32, #tpu.memory_space<vmem>>, %arg4: memref<6x256xf32, #tpu.memory_space<vmem>>) attributes {dimension_semantics = [#tpu.dimension_semantics<parallel>], iteration_bounds = array<i64: 1>, scalar_prefetch = 0 : i64, scratch_operands = 0 : i64, tpu.core_type = #tpu.core_type<tc>, window_params = [{transform_indices = @transform_0, window_bounds = array<i64: 6, 256>}, {pipeline_mode = #tpu.pipeline_mode<synchronous>, transform_indices = @transform_1, window_bounds = array<i64: 128, 32>}, {pipeline_mode = #tpu.pipeline_mode<synchronous>, transform_indices = @transform_2, window_bounds = array<i64: 128, 1>}, {transform_indices = @transform_3, window_bounds = array<i64: 6, 256>}]} {
    %c0 = arith.constant 0 : index
    %c0_0 = arith.constant 0 : index
    %0 = vector.load %arg1[%c0, %c0_0] : memref<6x256xf32, #tpu.memory_space<vmem>>, vector<6x256xf32>
    %c0_1 = arith.constant 0 : index
    %c0_2 = arith.constant 0 : index
    %1 = vector.load %arg2[%c0_1, %c0_2] : memref<128x32xf32, #tpu.memory_space<vmem>>, vector<32x6xf32>
    %cst = arith.constant dense<0.000000e+00> : vector<32x256xf32>
    %2 = tpu.matmul %1, %0, %cst {dimension_numbers = #tpu.dot_dimension_numbers<[1], [0], [0], [1], [0, 0, 1, 1], [], []>} : vector<32x6xf32>, vector<6x256xf32>, vector<32x256xf32> -> vector<32x256xf32>
    %c0_3 = arith.constant 0 : index
    %c0_4 = arith.constant 0 : index
    %3 = vector.load %arg3[%c0_3, %c0_4] : memref<128x1xf32, #tpu.memory_space<vmem>>, vector<32x1xf32>
    %4 = vector.broadcast %3 : vector<32x1xf32> to vector<32x256xf32>
    %5 = arith.addf %2, %4 : vector<32x256xf32>
    %6 = math.tanh %5 : vector<32x256xf32>
    %c32 = arith.constant 32 : index
    %c0_5 = arith.constant 0 : index
    %7 = vector.load %arg2[%c32, %c0_5] : memref<128x32xf32, #tpu.memory_space<vmem>>, vector<32x32xf32>
    %cst_6 = arith.constant dense<0.000000e+00> : vector<32x256xf32>
    %8 = tpu.matmul %7, %6, %cst_6 {dimension_numbers = #tpu.dot_dimension_numbers<[1], [0], [0], [1], [0, 0, 1, 1], [], []>} : vector<32x32xf32>, vector<32x256xf32>, vector<32x256xf32> -> vector<32x256xf32>
    %c32_7 = arith.constant 32 : index
    %c0_8 = arith.constant 0 : index
    %9 = vector.load %arg3[%c32_7, %c0_8] : memref<128x1xf32, #tpu.memory_space<vmem>>, vector<32x1xf32>
    %10 = vector.broadcast %9 : vector<32x1xf32> to vector<32x256xf32>
    %11 = arith.addf %8, %10 : vector<32x256xf32>
    %12 = math.tanh %11 : vector<32x256xf32>
    %c64 = arith.constant 64 : index
    %c0_9 = arith.constant 0 : index
    %13 = vector.load %arg2[%c64, %c0_9] : memref<128x32xf32, #tpu.memory_space<vmem>>, vector<32x32xf32>
    %cst_10 = arith.constant dense<0.000000e+00> : vector<32x256xf32>
    %14 = tpu.matmul %13, %12, %cst_10 {dimension_numbers = #tpu.dot_dimension_numbers<[1], [0], [0], [1], [0, 0, 1, 1], [], []>} : vector<32x32xf32>, vector<32x256xf32>, vector<32x256xf32> -> vector<32x256xf32>
    %c64_11 = arith.constant 64 : index
    %c0_12 = arith.constant 0 : index
    %15 = vector.load %arg3[%c64_11, %c0_12] : memref<128x1xf32, #tpu.memory_space<vmem>>, vector<32x1xf32>
    %16 = vector.broadcast %15 : vector<32x1xf32> to vector<32x256xf32>
    %17 = arith.addf %14, %16 : vector<32x256xf32>
    %18 = math.tanh %17 : vector<32x256xf32>
    %c96 = arith.constant 96 : index
    %c0_13 = arith.constant 0 : index
    %19 = vector.load %arg2[%c96, %c0_13] : memref<128x32xf32, #tpu.memory_space<vmem>>, vector<6x32xf32>
    %cst_14 = arith.constant dense<0.000000e+00> : vector<6x256xf32>
    %20 = tpu.matmul %19, %18, %cst_14 {dimension_numbers = #tpu.dot_dimension_numbers<[1], [0], [0], [1], [0, 0, 1, 1], [], []>} : vector<6x32xf32>, vector<32x256xf32>, vector<6x256xf32> -> vector<6x256xf32>
    %c96_15 = arith.constant 96 : index
    %c0_16 = arith.constant 0 : index
    %21 = vector.load %arg3[%c96_15, %c0_16] : memref<128x1xf32, #tpu.memory_space<vmem>>, vector<6x1xf32>
    %22 = vector.broadcast %21 : vector<6x1xf32> to vector<6x256xf32>
    %23 = arith.addf %20, %22 : vector<6x256xf32>
    %c0_17 = arith.constant 0 : index
    %c0_18 = arith.constant 0 : index
    %24 = vector.load %arg4[%c0_17, %c0_18] : memref<6x256xf32, #tpu.memory_space<vmem>>, vector<6x256xf32>
    tpu.vector_store %arg4[%c0_17, %c0_18], %23 {strides = array<i32>} : memref<6x256xf32, #tpu.memory_space<vmem>>, vector<6x256xf32>,
    return
  }
  func.func @transform_0(%arg0: i32) -> (i32, i32) {
    %c0_i32 = arith.constant 0 : i32
    %c0_i32_0 = arith.constant 0 : i32
    return %c0_i32, %arg0 : i32, i32
  }
  func.func @transform_1(%arg0: i32) -> (i32, i32) {
    %c0_i32 = arith.constant 0 : i32
    %c0_i32_0 = arith.constant 0 : i32
    %c0_i32_1 = arith.constant 0 : i32
    return %c0_i32, %c0_i32_0 : i32, i32
  }
  func.func @transform_2(%arg0: i32) -> (i32, i32) {
    %c0_i32 = arith.constant 0 : i32
    %c0_i32_0 = arith.constant 0 : i32
    %c0_i32_1 = arith.constant 0 : i32
    return %c0_i32, %c0_i32_0 : i32, i32
  }
  func.func @transform_3(%arg0: i32) -> (i32, i32) {
    %c0_i32 = arith.constant 0 : i32
    %c0_i32_0 = arith.constant 0 : i32
    return %c0_i32, %arg0 : i32, i32
  }
}

</mosaic_0001>

<llo_original>
// kernel: nn_transform.1
$region0: #{nn_transform.1}
  #allocation0 [shape = 'u32[]', space=smem, size = 0x4, offset = 0x4, fixed_abs, tag = 'smem constant byte address 0x4 - core index']
  #allocation1 [shape = 'u32[144,128]{1,0:T(1,128)}', space=vmem, size = 0x12000, scoped, tag = 'internal scratch']
  %s0 = inlined_call_operand.vmem [shape: f32[6,256], index: 0, kind: input, shape index: {}]
  %s1 = inlined_call_operand.vmem [shape: f32[128,32], index: 1, kind: input, shape index: {}]
  %s2 = inlined_call_operand.vmem [shape: f32[128,1], index: 2, kind: input, shape index: {}]
  %s3 = inlined_call_operand.vmem [shape: f32[6,256], index: 3, kind: output, shape index: {}]
  %s4 = sld [smem:[#allocation0]]
  $region22: #{nn_transform.1} parent=0
    _
  %s6 = ssub.s32 1, %s4
  %s7 = scalar_select 0, %s6, %s4
  // Predicated region
  $region2: #{nn_transform.1} parent=0 // pred_check
    _
  $region3: #{nn_transform.1} parent=0 // pred_check_branch
    %9 = sbr.rel (0) target = $region5
  $region4: #{nn_transform.1} parent=0 // pred_region
    _
  $region5: #{nn_transform.1} parent=0 // pred_fallthru
    _
  // Predicated region
  $region6: #{nn_transform.1} parent=0 // pred_check
    _
  $region7: #{nn_transform.1} parent=0 // pred_check_branch
    %11 = sbr.rel (0) target = $region9
  $region8: #{nn_transform.1} parent=0 // pred_region
    _
  $region9: #{nn_transform.1} parent=0 // pred_fallthru
    _
  // Predicated region
  $region10: #{nn_transform.1} parent=0 // pred_check
    _
  $region11: #{nn_transform.1} parent=0 // pred_check_branch
    %13 = sbr.rel (0) target = $region13
  $region12: #{nn_transform.1} parent=0 // pred_region
    _
  $region13: #{nn_transform.1} parent=0 // pred_fallthru
    _
  %v14 = vld [vmem:[%s0] sm:$0x3f]
  %v15 = vld [vmem:[%s0 + $0x8] sm:$0x3f]
  %v16 = vld [vmem:[%s1] sm:$0xff]
  %v17 = vld [vmem:[%s1 + $0x8] sm:$0xff]
  %v18 = vld [vmem:[%s1 + $0x10] sm:$0xff]
  %v19 = vld [vmem:[%s1 + $0x18] sm:$0xff]
  %v20 = vld [vmem:[%s2] sm:$0xff]
  %v21 = vld [vmem:[%s2 + $0x8] sm:$0xff]
  %v22 = vld [vmem:[%s2 + $0x10] sm:$0xff]
  %v23 = vld [vmem:[%s2 + $0x18] sm:$0xff]
  %25 = vset.pattern.permute.xlu0 0
  %26 = vperm.xlu0 %25, %v20
  %v27 = vpop.permute.xlu0 %26
  %30 = vset.pattern.permute.xlu0 0
  %31 = vperm.xlu0 %30, %v21
  %v32 = vpop.permute.xlu0 %31
  %35 = vset.pattern.permute.xlu0 0
  %36 = vperm.xlu0 %35, %v22
  %v37 = vpop.permute.xlu0 %36
  %40 = vset.pattern.permute.xlu0 0
  %41 = vperm.xlu0 %40, %v23
  %v42 = vpop.permute.xlu0 %41
  %vm44 = vcmask 48128
  %v46 = vsel %vm44, %v16, 0
  %v49 = vsel %vm44, %v17, 0
  %v52 = vsel %vm44, %v18, 0
  %v55 = vsel %vm44, %v19, 0
  %vm57 = vcmask 1045504
  %v59 = vsel %vm57, %v14, 0
  %v62 = vsel %vm57, %v15, 0
  %64 = vmatprep.subr.mxu0 0.0
  %65 = vmatpush1.msra.mxu0 0.0
  %66 = vmatprep.subr.mxu0 0.0
  %67 = vmatpush1.msra.mxu0 0.0
  %68 = vmatprep.subr.mxu0 0.0
  %69 = vmatpush1.msra.mxu0 0.0
  %70 = vmatprep.subr.mxu0 0.0
  %71 = vmatpush1.msra.mxu0 0.0
  %72 = vmatprep.subr.mxu0 0.0
  %73 = vmatpush1.msra.mxu0 0.0
  %74 = vmatprep.subr.mxu0 0.0
  %75 = vmatpush1.msra.mxu0 0.0
  %76 = vmatprep.subr.mxu0 0.0
  %77 = vmatpush1.msra.mxu0 0.0
  %78 = vmatprep.subr.mxu0 0.0
  %79 = vmatpush1.msra.mxu0 0.0
  %80 = vmatprep.subr.mxu0 0.0
  %81 = vmatpush1.msra.mxu0 0.0
  %82 = vmatprep.subr.mxu0 0.0
  %83 = vmatpush1.msra.mxu0 0.0
  %84 = vmatprep.subr.mxu0 0.0
  %85 = vmatpush1.msra.mxu0 0.0
  %86 = vmatprep.subr.mxu0 0.0
  %87 = vmatpush1.msra.mxu0 0.0
  %88 = vmatprep.subr.mxu0 0.0
  %89 = vmatpush1.msra.mxu0 0.0
  %90 = vmatprep.subr.mxu0 0.0
  %91 = vmatpush1.msra.mxu0 0.0
  %92 = vmatprep.subr.mxu0 0.0
  %93 = vmatpush1.msra.mxu0 0.0
  %94 = vmatprep.subr.mxu0 %v62
  %95 = vmatpush1.msra.mxu0 %v59
  %96 = vmatprep.subr.mxu0 0.0
  %97 = vmatpush2.msra.mxu0 0.0
  %98 = vmatprep.subr.mxu0 0.0
  %99 = vmatpush2.msra.mxu0 0.0
  %100 = vmatprep.subr.mxu0 0.0
  %101 = vmatpush2.msra.mxu0 0.0
  %102 = vmatprep.subr.mxu0 0.0
  %103 = vmatpush2.msra.mxu0 0.0
  %104 = vmatprep.subr.mxu0 0.0
  %105 = vmatpush2.msra.mxu0 0.0
  %106 = vmatprep.subr.mxu0 0.0
  %107 = vmatpush2.msra.mxu0 0.0
  %108 = vmatprep.subr.mxu0 0.0
  %109 = vmatpush2.msra.mxu0 0.0
  %110 = vmatprep.subr.mxu0 0.0
  %111 = vmatpush2.msra.mxu0 0.0
  %112 = vmatprep.subr.mxu0 0.0
  %113 = vmatpush2.msra.mxu0 0.0
  %114 = vmatprep.subr.mxu0 0.0
  %115 = vmatpush2.msra.mxu0 0.0
  %116 = vmatprep.subr.mxu0 0.0
  %117 = vmatpush2.msra.mxu0 0.0
  %118 = vmatprep.subr.mxu0 0.0
  %119 = vmatpush2.msra.mxu0 0.0
  %120 = vmatprep.subr.mxu0 0.0
  %121 = vmatpush2.msra.mxu0 0.0
  %122 = vmatprep.subr.mxu0 0.0
  %123 = vmatpush2.msra.mxu0 0.0
  %124 = vmatprep.subr.mxu0 0.0
  %125 = vmatpush2.msra.mxu0 0.0
  %126 = vmatprep.subr.mxu0 0.0
  %127 = vmatpush2.msra.mxu0 0.0
  %128 = vmatprep.mubr.f32.mxu0 0.0
  %129 = vmatmul.mubr.f32.gmra.mxu0 %v46
  %v130 = vpop.f32.mrf.mxu0
  %v131 = vadd.f32 %v27, %v130
  %v132 = vpop.f32.mrf.mxu0
  %v133 = vadd.f32 %v27, %v132
  %134 = vmatprep.mubr.f32.mxu0 0.0
  %135 = vmatmul.mubr.f32.gmra.mxu0 %v49
  %v136 = vpop.f32.mrf.mxu0
  %v137 = vadd.f32 %v32, %v136
  %v138 = vpop.f32.mrf.mxu0
  %v139 = vadd.f32 %v32, %v138
  %140 = vmatprep.mubr.f32.mxu0 0.0
  %141 = vmatmul.mubr.f32.gmra.mxu0 %v52
  %v142 = vpop.f32.mrf.mxu0
  %v143 = vadd.f32 %v37, %v142
  %v144 = vpop.f32.mrf.mxu0
  %v145 = vadd.f32 %v37, %v144
  %146 = vmatprep.mubr.f32.mxu0 0.0
  %147 = vmatmul.mubr.f32.gmra.mxu0 %v55
  %v148 = vpop.f32.mrf.mxu0
  %v149 = vadd.f32 %v42, %v148
  %v150 = vpop.f32.mrf.mxu0
  %v151 = vadd.f32 %v42, %v150
  %152 = vdwg.mxu0
  %v153 = vtanh.pop %v131
  %v154 = vtanh.pop %v133
  %v155 = vtanh.pop %v137
  %v156 = vtanh.pop %v139
  %v157 = vtanh.pop %v143
  %v158 = vtanh.pop %v145
  %v159 = vtanh.pop %v149
  %v160 = vtanh.pop %v151
  %v161 = vld [vmem:[%s1 + $0x20] sm:$0xff]
  %v162 = vld [vmem:[%s1 + $0x28] sm:$0xff]
  %v163 = vld [vmem:[%s1 + $0x30] sm:$0xff]
  %v164 = vld [vmem:[%s1 + $0x38] sm:$0xff]
  %v165 = vld [vmem:[%s2 + $0x20] sm:$0xff]
  %v166 = vld [vmem:[%s2 + $0x28] sm:$0xff]
  %v167 = vld [vmem:[%s2 + $0x30] sm:$0xff]
  %v168 = vld [vmem:[%s2 + $0x38] sm:$0xff]
  %170 = vset.pattern.permute.xlu0 0
  %171 = vperm.xlu0 %170, %v165
  %v172 = vpop.permute.xlu0 %171
  %175 = vset.pattern.permute.xlu0 0
  %176 = vperm.xlu0 %175, %v166
  %v177 = vpop.permute.xlu0 %176
  %180 = vset.pattern.permute.xlu0 0
  %181 = vperm.xlu0 %180, %v167
  %v182 = vpop.permute.xlu0 %181
  %185 = vset.pattern.permute.xlu0 0
  %186 = vperm.xlu0 %185, %v168
  %v187 = vpop.permute.xlu0 %186
  %vm189 = vcmask 261120
  %v191 = vsel %vm189, %v161, 0
  %v194 = vsel %vm189, %v162, 0
  %v197 = vsel %vm189, %v163, 0
  %v200 = vsel %vm189, %v164, 0
  %202 = vmatprep.subr.mxu0 0.0
  %203 = vmatpush1.msra.mxu0 0.0
  %204 = vmatprep.subr.mxu0 0.0
  %205 = vmatpush1.msra.mxu0 0.0
  %206 = vmatprep.subr.mxu0 0.0
  %207 = vmatpush1.msra.mxu0 0.0
  %208 = vmatprep.subr.mxu0 0.0
  %209 = vmatpush1.msra.mxu0 0.0
  %210 = vmatprep.subr.mxu0 0.0
  %211 = vmatpush1.msra.mxu0 0.0
  %212 = vmatprep.subr.mxu0 0.0
  %213 = vmatpush1.msra.mxu0 0.0
  %214 = vmatprep.subr.mxu0 0.0
  %215 = vmatpush1.msra.mxu0 0.0
  %216 = vmatprep.subr.mxu0 0.0
  %217 = vmatpush1.msra.mxu0 0.0
  %218 = vmatprep.subr.mxu0 0.0
  %219 = vmatpush1.msra.mxu0 0.0
  %220 = vmatprep.subr.mxu0 0.0
  %221 = vmatpush1.msra.mxu0 0.0
  %222 = vmatprep.subr.mxu0 0.0
  %223 = vmatpush1.msra.mxu0 0.0
  %224 = vmatprep.subr.mxu0 0.0
  %225 = vmatpush1.msra.mxu0 0.0
  %226 = vmatprep.subr.mxu0 %v160
  %227 = vmatpush1.msra.mxu0 %v159
  %228 = vmatprep.subr.mxu0 %v158
  %229 = vmatpush1.msra.mxu0 %v157
  %230 = vmatprep.subr.mxu0 %v156
  %231 = vmatpush1.msra.mxu0 %v155
  %232 = vmatprep.subr.mxu0 %v154
  %233 = vmatpush1.msra.mxu0 %v153
  %234 = vmatprep.subr.mxu0 0.0
  %235 = vmatpush2.msra.mxu0 0.0
  %236 = vmatprep.subr.mxu0 0.0
  %237 = vmatpush2.msra.mxu0 0.0
  %238 = vmatprep.subr.mxu0 0.0
  %239 = vmatpush2.msra.mxu0 0.0
  %240 = vmatprep.subr.mxu0 0.0
  %241 = vmatpush2.msra.mxu0 0.0
  %242 = vmatprep.subr.mxu0 0.0
  %243 = vmatpush2.msra.mxu0 0.0
  %244 = vmatprep.subr.mxu0 0.0
  %245 = vmatpush2.msra.mxu0 0.0
  %246 = vmatprep.subr.mxu0 0.0
  %247 = vmatpush2.msra.mxu0 0.0
  %248 = vmatprep.subr.mxu0 0.0
  %249 = vmatpush2.msra.mxu0 0.0
  %250 = vmatprep.subr.mxu0 0.0
  %251 = vmatpush2.msra.mxu0 0.0
  %252 = vmatprep.subr.mxu0 0.0
  %253 = vmatpush2.msra.mxu0 0.0
  %254 = vmatprep.subr.mxu0 0.0
  %255 = vmatpush2.msra.mxu0 0.0
  %256 = vmatprep.subr.mxu0 0.0
  %257 = vmatpush2.msra.mxu0 0.0
  %258 = vmatprep.subr.mxu0 0.0
  %259 = vmatpush2.msra.mxu0 0.0
  %260 = vmatprep.subr.mxu0 0.0
  %261 = vmatpush2.msra.mxu0 0.0
  %262 = vmatprep.subr.mxu0 0.0
  %263 = vmatpush2.msra.mxu0 0.0
  %264 = vmatprep.subr.mxu0 0.0
  %265 = vmatpush2.msra.mxu0 0.0
  %266 = vmatprep.mubr.f32.mxu0 0.0
  %267 = vmatmul.mubr.f32.gmra.mxu0 %v191
  %v268 = vpop.f32.mrf.mxu0
  %v269 = vadd.f32 %v172, %v268
  %v270 = vpop.f32.mrf.mxu0
  %v271 = vadd.f32 %v172, %v270
  %272 = vmatprep.mubr.f32.mxu0 0.0
  %273 = vmatmul.mubr.f32.gmra.mxu0 %v194
  %v274 = vpop.f32.mrf.mxu0
  %v275 = vadd.f32 %v177, %v274
  %v276 = vpop.f32.mrf.mxu0
  %v277 = vadd.f32 %v177, %v276
  %278 = vmatprep.mubr.f32.mxu0 0.0
  %279 = vmatmul.mubr.f32.gmra.mxu0 %v197
  %v280 = vpop.f32.mrf.mxu0
  %v281 = vadd.f32 %v182, %v280
  %v282 = vpop.f32.mrf.mxu0
  %v283 = vadd.f32 %v182, %v282
  %284 = vmatprep.mubr.f32.mxu0 0.0
  %285 = vmatmul.mubr.f32.gmra.mxu0 %v200
  %v286 = vpop.f32.mrf.mxu0
  %v287 = vadd.f32 %v187, %v286
  %v288 = vpop.f32.mrf.mxu0
  %v289 = vadd.f32 %v187, %v288
  %290 = vdwg.mxu0
  %v291 = vtanh.pop %v269
  %v292 = vtanh.pop %v271
  %v293 = vtanh.pop %v275
  %v294 = vtanh.pop %v277
  %v295 = vtanh.pop %v281
  %v296 = vtanh.pop %v283
  %v297 = vtanh.pop %v287
  %v298 = vtanh.pop %v289
  %v299 = vld [vmem:[%s1 + $0x40] sm:$0xff]
  %v300 = vld [vmem:[%s1 + $0x48] sm:$0xff]
  %v301 = vld [vmem:[%s1 + $0x50] sm:$0xff]
  %v302 = vld [vmem:[%s1 + $0x58] sm:$0xff]
  %v303 = vld [vmem:[%s2 + $0x40] sm:$0xff]
  %v304 = vld [vmem:[%s2 + $0x48] sm:$0xff]
  %v305 = vld [vmem:[%s2 + $0x50] sm:$0xff]
  %v306 = vld [vmem:[%s2 + $0x58] sm:$0xff]
  %308 = vset.pattern.permute.xlu0 0
  %309 = vperm.xlu0 %308, %v303
  %v310 = vpop.permute.xlu0 %309
  %313 = vset.pattern.permute.xlu0 0
  %314 = vperm.xlu0 %313, %v304
  %v315 = vpop.permute.xlu0 %314
  %318 = vset.pattern.permute.xlu0 0
  %319 = vperm.xlu0 %318, %v305
  %v320 = vpop.permute.xlu0 %319
  %323 = vset.pattern.permute.xlu0 0
  %324 = vperm.xlu0 %323, %v306
  %v325 = vpop.permute.xlu0 %324
  %v328 = vsel %vm189, %v299, 0
  %v331 = vsel %vm189, %v300, 0
  %v334 = vsel %vm189, %v301, 0
  %v337 = vsel %vm189, %v302, 0
  %339 = vmatprep.subr.mxu0 0.0
  %340 = vmatpush1.msra.mxu0 0.0
  %341 = vmatprep.subr.mxu0 0.0
  %342 = vmatpush1.msra.mxu0 0.0
  %343 = vmatprep.subr.mxu0 0.0
  %344 = vmatpush1.msra.mxu0 0.0
  %345 = vmatprep.subr.mxu0 0.0
  %346 = vmatpush1.msra.mxu0 0.0
  %347 = vmatprep.subr.mxu0 0.0
  %348 = vmatpush1.msra.mxu0 0.0
  %349 = vmatprep.subr.mxu0 0.0
  %350 = vmatpush1.msra.mxu0 0.0
  %351 = vmatprep.subr.mxu0 0.0
  %352 = vmatpush1.msra.mxu0 0.0
  %353 = vmatprep.subr.mxu0 0.0
  %354 = vmatpush1.msra.mxu0 0.0
  %355 = vmatprep.subr.mxu0 0.0
  %356 = vmatpush1.msra.mxu0 0.0
  %357 = vmatprep.subr.mxu0 0.0
  %358 = vmatpush1.msra.mxu0 0.0
  %359 = vmatprep.subr.mxu0 0.0
  %360 = vmatpush1.msra.mxu0 0.0
  %361 = vmatprep.subr.mxu0 0.0
  %362 = vmatpush1.msra.mxu0 0.0
  %363 = vmatprep.subr.mxu0 %v298
  %364 = vmatpush1.msra.mxu0 %v297
  %365 = vmatprep.subr.mxu0 %v296
  %366 = vmatpush1.msra.mxu0 %v295
  %367 = vmatprep.subr.mxu0 %v294
  %368 = vmatpush1.msra.mxu0 %v293
  %369 = vmatprep.subr.mxu0 %v292
  %370 = vmatpush1.msra.mxu0 %v291
  %371 = vmatprep.subr.mxu0 0.0
  %372 = vmatpush2.msra.mxu0 0.0
  %373 = vmatprep.subr.mxu0 0.0
  %374 = vmatpush2.msra.mxu0 0.0
  %375 = vmatprep.subr.mxu0 0.0
  %376 = vmatpush2.msra.mxu0 0.0
  %377 = vmatprep.subr.mxu0 0.0
  %378 = vmatpush2.msra.mxu0 0.0
  %379 = vmatprep.subr.mxu0 0.0
  %380 = vmatpush2.msra.mxu0 0.0
  %381 = vmatprep.subr.mxu0 0.0
  %382 = vmatpush2.msra.mxu0 0.0
  %383 = vmatprep.subr.mxu0 0.0
  %384 = vmatpush2.msra.mxu0 0.0
  %385 = vmatprep.subr.mxu0 0.0
  %386 = vmatpush2.msra.mxu0 0.0
  %387 = vmatprep.subr.mxu0 0.0
  %388 = vmatpush2.msra.mxu0 0.0
  %389 = vmatprep.subr.mxu0 0.0
  %390 = vmatpush2.msra.mxu0 0.0
  %391 = vmatprep.subr.mxu0 0.0
  %392 = vmatpush2.msra.mxu0 0.0
  %393 = vmatprep.subr.mxu0 0.0
  %394 = vmatpush2.msra.mxu0 0.0
  %395 = vmatprep.subr.mxu0 0.0
  %396 = vmatpush2.msra.mxu0 0.0
  %397 = vmatprep.subr.mxu0 0.0
  %398 = vmatpush2.msra.mxu0 0.0
  %399 = vmatprep.subr.mxu0 0.0
  %400 = vmatpush2.msra.mxu0 0.0
  %401 = vmatprep.subr.mxu0 0.0
  %402 = vmatpush2.msra.mxu0 0.0
  %403 = vmatprep.mubr.f32.mxu0 0.0
  %404 = vmatmul.mubr.f32.gmra.mxu0 %v328
  %v405 = vpop.f32.mrf.mxu0
  %v406 = vadd.f32 %v310, %v405
  %v407 = vpop.f32.mrf.mxu0
  %v408 = vadd.f32 %v310, %v407
  %409 = vmatprep.mubr.f32.mxu0 0.0
  %410 = vmatmul.mubr.f32.gmra.mxu0 %v331
  %v411 = vpop.f32.mrf.mxu0
  %v412 = vadd.f32 %v315, %v411
  %v413 = vpop.f32.mrf.mxu0
  %v414 = vadd.f32 %v315, %v413
  %415 = vmatprep.mubr.f32.mxu0 0.0
  %416 = vmatmul.mubr.f32.gmra.mxu0 %v334
  %v417 = vpop.f32.mrf.mxu0
  %v418 = vadd.f32 %v320, %v417
  %v419 = vpop.f32.mrf.mxu0
  %v420 = vadd.f32 %v320, %v419
  %421 = vmatprep.mubr.f32.mxu0 0.0
  %422 = vmatmul.mubr.f32.gmra.mxu0 %v337
  %v423 = vpop.f32.mrf.mxu0
  %v424 = vadd.f32 %v325, %v423
  %v425 = vpop.f32.mrf.mxu0
  %v426 = vadd.f32 %v325, %v425
  %427 = vdwg.mxu0
  %v428 = vtanh.pop %v406
  %v429 = vtanh.pop %v408
  %v430 = vtanh.pop %v412
  %v431 = vtanh.pop %v414
  %v432 = vtanh.pop %v418
  %v433 = vtanh.pop %v420
  %v434 = vtanh.pop %v424
  %v435 = vtanh.pop %v426
  %v436 = vld [vmem:[%s1 + $0x60] sm:$0x3f]
  %v437 = vld [vmem:[%s2 + $0x60] sm:$0x3f]
  %439 = vset.pattern.permute.xlu0 0
  %440 = vperm.xlu0 %439, %v437
  %v441 = vpop.permute.xlu0 %440
  %v444 = vsel %vm189, %v436, 0
  %446 = vmatprep.subr.mxu0 0.0
  %447 = vmatpush1.msra.mxu0 0.0
  %448 = vmatprep.subr.mxu0 0.0
  %449 = vmatpush1.msra.mxu0 0.0
  %450 = vmatprep.subr.mxu0 0.0
  %451 = vmatpush1.msra.mxu0 0.0
  %452 = vmatprep.subr.mxu0 0.0
  %453 = vmatpush1.msra.mxu0 0.0
  %454 = vmatprep.subr.mxu0 0.0
  %455 = vmatpush1.msra.mxu0 0.0
  %456 = vmatprep.subr.mxu0 0.0
  %457 = vmatpush1.msra.mxu0 0.0
  %458 = vmatprep.subr.mxu0 0.0
  %459 = vmatpush1.msra.mxu0 0.0
  %460 = vmatprep.subr.mxu0 0.0
  %461 = vmatpush1.msra.mxu0 0.0
  %462 = vmatprep.subr.mxu0 0.0
  %463 = vmatpush1.msra.mxu0 0.0
  %464 = vmatprep.subr.mxu0 0.0
  %465 = vmatpush1.msra.mxu0 0.0
  %466 = vmatprep.subr.mxu0 0.0
  %467 = vmatpush1.msra.mxu0 0.0
  %468 = vmatprep.subr.mxu0 0.0
  %469 = vmatpush1.msra.mxu0 0.0
  %470 = vmatprep.subr.mxu0 %v435
  %471 = vmatpush1.msra.mxu0 %v434
  %472 = vmatprep.subr.mxu0 %v433
  %473 = vmatpush1.msra.mxu0 %v432
  %474 = vmatprep.subr.mxu0 %v431
  %475 = vmatpush1.msra.mxu0 %v430
  %476 = vmatprep.subr.mxu0 %v429
  %477 = vmatpush1.msra.mxu0 %v428
  %478 = vmatprep.subr.mxu0 0.0
  %479 = vmatpush2.msra.mxu0 0.0
  %480 = vmatprep.subr.mxu0 0.0
  %481 = vmatpush2.msra.mxu0 0.0
  %482 = vmatprep.subr.mxu0 0.0
  %483 = vmatpush2.msra.mxu0 0.0
  %484 = vmatprep.subr.mxu0 0.0
  %485 = vmatpush2.msra.mxu0 0.0
  %486 = vmatprep.subr.mxu0 0.0
  %487 = vmatpush2.msra.mxu0 0.0
  %488 = vmatprep.subr.mxu0 0.0
  %489 = vmatpush2.msra.mxu0 0.0
  %490 = vmatprep.subr.mxu0 0.0
  %491 = vmatpush2.msra.mxu0 0.0
  %492 = vmatprep.subr.mxu0 0.0
  %493 = vmatpush2.msra.mxu0 0.0
  %494 = vmatprep.subr.mxu0 0.0
  %495 = vmatpush2.msra.mxu0 0.0
  %496 = vmatprep.subr.mxu0 0.0
  %497 = vmatpush2.msra.mxu0 0.0
  %498 = vmatprep.subr.mxu0 0.0
  %499 = vmatpush2.msra.mxu0 0.0
  %500 = vmatprep.subr.mxu0 0.0
  %501 = vmatpush2.msra.mxu0 0.0
  %502 = vmatprep.subr.mxu0 0.0
  %503 = vmatpush2.msra.mxu0 0.0
  %504 = vmatprep.subr.mxu0 0.0
  %505 = vmatpush2.msra.mxu0 0.0
  %506 = vmatprep.subr.mxu0 0.0
  %507 = vmatpush2.msra.mxu0 0.0
  %508 = vmatprep.subr.mxu0 0.0
  %509 = vmatpush2.msra.mxu0 0.0
  %510 = vmatprep.mubr.f32.mxu0 0.0
  %511 = vmatmul.mubr.f32.gmra.mxu0 %v444
  %v512 = vpop.f32.mrf.mxu0
  %v513 = vadd.f32 %v441, %v512
  %v514 = vpop.f32.mrf.mxu0
  %v515 = vadd.f32 %v441, %v514
  %516 = vdwg.mxu0
  %517 = vst [vmem:[%s3] sm:$0x3f] %v513
  %518 = vst [vmem:[%s3 + $0x8] sm:$0x3f] %v515
  // Predicated region
  $region14: #{nn_transform.1} parent=0 // pred_check
    _
  $region15: #{nn_transform.1} parent=0 // pred_check_branch
    %520 = sbr.rel (0) target = $region17
  $region16: #{nn_transform.1} parent=0 // pred_region
    _
  $region17: #{nn_transform.1} parent=0 // pred_fallthru
    _
  // Predicated region
  $region18: #{nn_transform.1} parent=0 // pred_check
    _
  $region19: #{nn_transform.1} parent=0 // pred_check_branch
    %522 = sbr.rel (0) target = $region21
  $region20: #{nn_transform.1} parent=0 // pred_region
    _
  $region21: #{nn_transform.1} parent=0 // pred_fallthru
    _

</llo_original>
